<compile_context>
chip_gen: v7x
topology: tpu7x:2x2x1
jax: 0.10.0
libtpu: 0.0.40
codegen_flags: <defaults>
</compile_context>

<pallas_src>
import jax
import jax.numpy as jnp
from jax.experimental import pallas as pl
from jax.experimental.pallas import tpu as pltpu

BN_EPS = 1e-5


# ----------------------------------------------------------------------------
# Kernel
# ----------------------------------------------------------------------------
def dual_input_kernel(
    hidden_ref,    # (TB, S, H)  bf16   hidden-state tile
    struct_ref,    # (TB, F)     f32    structured-data tile
    att_w_ref,     # (1, H)      f32    attention Linear(H,1) weight row
    w1_ref,        # (F, 24)     f32    Linear(F,24) weight, BN1 folded in
    w2_ref,        # (24, 8)     f32    Linear(24,8) weight, BN2 folded in
    wc1a_ref,      # (H, 64)     f32    combined Linear, context part, BNc folded
    wc1b_ref,      # (8, 64)     f32    combined Linear, semb part,    BNc folded
    packed_ref,    # (4, 128)    f32    rows: bias1[:24], bias2[:8], biasc[:64], wc2[:64]
    bc2_ref,       # (1, 1)      f32    final bias (SMEM scalar)
    out_ref,       # (1, 1, TB)  f32    lane-dense output tile
):
    # Upcast once; all elementwise math stays fp32 (v5e has no bf16 VPU/EUP).
    hidden = hidden_ref[...].astype(jnp.float32)                  # (TB, S, H)

    # ---------- Attention ----------
    # energy = <h_t, w>  per token: VPU multiply + XLU lane-reduce instead of a
    # 1-output-column MXU matmul.  The attention bias is omitted: softmax(e+c)
    # == softmax(e), so it has no effect on the output (mathematically exact).
    att_w = att_w_ref[...].astype(jnp.float32)                    # (1, H)
    energy = jnp.sum(hidden * att_w[None, :, :], axis=-1)         # (TB, S)
    e_max = jnp.max(energy, axis=-1, keepdims=True)
    e_exp = jnp.exp(energy - e_max)
    denom = jnp.sum(e_exp, axis=-1, keepdims=True)                # (TB, 1)
    attn = e_exp * pl.reciprocal(denom, approx=True)              # EUP, not VALU divide
    context = jnp.sum(attn[:, :, None] * hidden, axis=1)          # (TB, H)

    # ---------- FFNN branch ----------
    # BatchNorm1d (eval) folded into weights/biases in the wrapper; Dropout == id.
    bias1 = packed_ref[0:1, 0:24]                                 # (1, 24)
    bias2 = packed_ref[1:2, 0:8]                                  # (1, 8)
    biasc = packed_ref[2:3, 0:64]                                 # (1, 64)
    wc2_r = packed_ref[3:4, 0:64]                                 # (1, 64)

    x = struct_ref[...].astype(jnp.float32)                       # (TB, F)
    h1 = jnp.dot(x, w1_ref[...], preferred_element_type=jnp.float32) + bias1
    h1 = jnp.maximum(h1, 0.0)                                     # ReLU
    semb = jnp.dot(h1, w2_ref[...], preferred_element_type=jnp.float32) + bias2

    # ---------- Combined head ----------
    # cat([context, semb], 1) @ Wc1^T == context @ Wc1a + semb @ Wc1b
    c1 = (jnp.dot(context, wc1a_ref[...], preferred_element_type=jnp.float32)
          + jnp.dot(semb, wc1b_ref[...], preferred_element_type=jnp.float32)
          + biasc)
    c1 = jnp.maximum(c1, 0.0)

    # Final Linear(64, 1) as a VPU reduce; store lane-dense (batch on lanes).
    out = jnp.sum(c1 * wc2_r, axis=-1) + bc2_ref[0, 0]            # (TB,)
    out_ref[...] = out[None, None, :].astype(out_ref.dtype)


# ----------------------------------------------------------------------------
# Wrapper helpers
# ----------------------------------------------------------------------------
def _round_up(x, m):
    return (x + m - 1) // m * m


def _pick_batch_tile(B, S, H, *, elem_bytes=2, budget_bytes=24 << 20):
    """Largest multiple-of-8 batch tile whose double-buffered bf16 hidden block
    fits the VMEM budget (sized conservatively for v7x's 64 MiB physical /
    32 MiB scoped VMEM; also fine for v5e/v6e)."""
    per_batch_row = 2 * S * H * elem_bytes            # x2: double buffering
    tb = (budget_bytes // max(per_batch_row, 1)) // 8 * 8
    tb = max(8, min(tb, _round_up(B, 8)))
    return tb


def _bn_scale_shift(gamma, beta, rmean, rvar):
    s = gamma / jnp.sqrt(rvar + BN_EPS)
    t = beta - rmean * s
    return s, t


def init_params(key, num_structured_features, context_vector_dim):
    """Deterministic synthetic params (PyTorch shapes: Linear weight is (out, in))."""
    F, H = num_structured_features, context_vector_dim
    ks = jax.random.split(key, 8)

    def lin(k, out_dim, in_dim):
        kw, kb = jax.random.split(k)
        w = 0.05 * jax.random.normal(kw, (out_dim, in_dim), jnp.float32)
        b = 0.05 * jax.random.normal(kb, (out_dim,), jnp.float32)
        return w, b

    def bn(n):
        i = jnp.arange(n, dtype=jnp.float32)
        return dict(gamma=1.0 + 0.01 * i, beta=0.01 * i,
                    rmean=0.02 * i - 0.05, rvar=1.0 + 0.03 * i)

    p = {}
    p["att_w"], p["att_b"] = lin(ks[0], 1, H)                 # Attention: Linear(H, 1)
    p["w1"], p["b1"] = lin(ks[1], 24, F)                      # Linear(F, 24)
    p["bn1"] = bn(24)
    p["w2"], p["b2"] = lin(ks[2], 8, 24)                      # Linear(24, 8)
    p["bn2"] = bn(8)
    p["wc1"], p["bc1"] = lin(ks[3], 64, H + 8)                # Linear(H+8, 64)
    p["bnc"] = bn(64)
    p["wc2"], p["bc2"] = lin(ks[4], 1, 64)                    # Linear(64, 1)
    return p


def dual_input_forward(last_hidden_state, structured_data, params, *, batch_tile=None):
    """Pallas forward. `last_hidden_state` stands in for the DistilBERT output."""
    B, S, H = last_hidden_state.shape
    F = structured_data.shape[1]
    p = params

    # Fold eval-mode BatchNorm1d into the preceding Linear (exact):
    #   (x @ W^T + b) * s + t  ==  x @ (W^T * s) + (b * s + t)
    s1, t1 = _bn_scale_shift(**p["bn1"])
    s2, t2 = _bn_scale_shift(**p["bn2"])
    sc, tc = _bn_scale_shift(**p["bnc"])
    w1 = p["w1"].T * s1
    bias1 = p["b1"] * s1 + t1                                     # (24,)
    w2 = p["w2"].T * s2
    bias2 = p["b2"] * s2 + t2                                     # (8,)
    wc1 = p["wc1"].T * sc                                         # (H+8, 64)
    biasc = p["bc1"] * sc + tc                                    # (64,)
    wc1a, wc1b = wc1[:H], wc1[H:]
    wc2_row = p["wc2"].reshape(64)                                # (64,)

    # Pack small per-feature vectors into one lane-aligned (4, 128) block:
    # one DMA instead of many sub-tile transfers.  att_b is dropped (softmax
    # shift-invariance) — exact.
    packed = jnp.zeros((4, 128), jnp.float32)
    packed = packed.at[0, :24].set(bias1)
    packed = packed.at[1, :8].set(bias2)
    packed = packed.at[2, :64].set(biasc)
    packed = packed.at[3, :64].set(wc2_row)

    bc2 = p["bc2"].reshape(1, 1).astype(jnp.float32)              # true scalar -> SMEM

    # Batch tiling (multiple of 8 for the sublane constraint on struct/out).
    TB = batch_tile if batch_tile is not None else _pick_batch_tile(B, S, H)
    TB = max(8, _round_up(int(TB), 8))
    B_pad = _round_up(B, TB)
    num_tiles = B_pad // TB

    hidden = last_hidden_state.astype(jnp.bfloat16)               # halve HBM bytes
    structured = structured_data.astype(jnp.float32)
    if B_pad != B:
        hidden = jnp.pad(hidden, ((0, B_pad - B), (0, 0), (0, 0)))
        structured = jnp.pad(structured, ((0, B_pad - B), (0, 0)))

    out = pl.pallas_call(
        dual_input_kernel,
        out_shape=jax.ShapeDtypeStruct((num_tiles, 1, TB), jnp.float32),
        grid=(num_tiles,),
        in_specs=[
            pl.BlockSpec((TB, S, H), lambda i: (i, 0, 0)),        # hidden tile
            pl.BlockSpec((TB, F), lambda i: (i, 0)),              # struct tile
            pl.BlockSpec((1, H), lambda i: (0, 0)),               # att_w
            pl.BlockSpec((F, 24), lambda i: (0, 0)),              # w1 (BN folded)
            pl.BlockSpec((24, 8), lambda i: (0, 0)),              # w2 (BN folded)
            pl.BlockSpec((H, 64), lambda i: (0, 0)),              # wc1a (BN folded)
            pl.BlockSpec((8, 64), lambda i: (0, 0)),              # wc1b (BN folded)
            pl.BlockSpec((4, 128), lambda i: (0, 0)),             # packed biases + wc2
            pl.BlockSpec(memory_space=pltpu.MemorySpace.SMEM),    # bc2 scalar
        ],
        out_specs=pl.BlockSpec((1, 1, TB), lambda i: (i, 0, 0)),  # lane-dense output
        compiler_params=pltpu.CompilerParams(
            dimension_semantics=("parallel",),        # shard batch tiles over TCs (v7x)
            vmem_limit_bytes=32 * 1024 * 1024,        # tile heuristic keeps us well under
        ),
    )(hidden, structured, p["att_w"], w1, w2, wc1a, wc1b, packed, bc2)

    return out.reshape(B_pad, 1)[:B]


# ----------------------------------------------------------------------------
# Pure-JAX reference (mirrors the PyTorch module in eval mode)
# ----------------------------------------------------------------------------
def reference_forward(last_hidden_state, structured_data, params):
    p = params
    energy = last_hidden_state @ p["att_w"].T + p["att_b"]        # (B, S, 1)
    attn = jax.nn.softmax(energy, axis=1)
    context = jnp.sum(attn * last_hidden_state, axis=1)           # (B, H)
    s1, t1 = _bn_scale_shift(**p["bn1"])
    s2, t2 = _bn_scale_shift(**p["bn2"])
    h = structured_data @ p["w1"].T + p["b1"]
    h = jnp.maximum(h * s1 + t1, 0.0)
    h = h @ p["w2"].T + p["b2"]
    semb = h * s2 + t2
    sc, tc = _bn_scale_shift(**p["bnc"])
    comb = jnp.concatenate([context, semb], axis=1)
    c = comb @ p["wc1"].T + p["bc1"]
    c = jnp.maximum(c * sc + tc, 0.0)
    return c @ p["wc2"].T + p["bc2"]


if __name__ == "__main__":
    B, S, H, F = 32, 8, 32, 10   # batch, seq, context_vector_dim, num_structured_features
    key = jax.random.PRNGKey(0)
    k_h, k_s, k_p = jax.random.split(key, 3)

    # Stand-in for DistilBERT(input_ids, attention_mask).last_hidden_state
    last_hidden_state = jax.random.normal(k_h, (B, S, H), jnp.float32)
    structured_data = jax.random.normal(k_s, (B, F), jnp.float32)
    params = init_params(k_p, F, H)

    # batch_tile=8 -> grid=(4,): exercises the pipelined, parallel batch tiling.
    out = dual_input_forward(last_hidden_state, structured_data, params, batch_tile=8)
    out = jax.block_until_ready(out)

    # Reference sees the same bf16-rounded hidden state the kernel consumes.
    hidden_bf16 = last_hidden_state.astype(jnp.bfloat16).astype(jnp.float32)
    ref = reference_forward(hidden_bf16, structured_data, params)

    assert out.shape == (B, 1), out.shape
    assert jnp.allclose(out, ref, atol=2e-3, rtol=2e-3), (out, ref)
    print("KERNEL_OK")
</pallas_src>

<mosaic_0001>
module attributes {stable_mosaic.version = 11 : i64} {
  func.func @dual_input_kernel(%arg0: i32, %arg1: memref<8x8x32xbf16, #tpu.memory_space<vmem>>, %arg2: memref<8x10xf32, #tpu.memory_space<vmem>>, %arg3: memref<1x32xf32, #tpu.memory_space<vmem>>, %arg4: memref<10x24xf32, #tpu.memory_space<vmem>>, %arg5: memref<24x8xf32, #tpu.memory_space<vmem>>, %arg6: memref<32x64xf32, #tpu.memory_space<vmem>>, %arg7: memref<8x64xf32, #tpu.memory_space<vmem>>, %arg8: memref<4x128xf32, #tpu.memory_space<vmem>>, %arg9: memref<1x1xf32, #tpu.memory_space<smem>>, %arg10: memref<1x1x8xf32, #tpu.memory_space<vmem>>) attributes {dimension_semantics = [#tpu.dimension_semantics<parallel>], iteration_bounds = array<i64: 4>, scalar_prefetch = 0 : i64, scratch_operands = 0 : i64, tpu.core_type = #tpu.core_type<tc>, window_params = [{transform_indices = @transform_0, window_bounds = array<i64: 8, 8, 32>}, {transform_indices = @transform_1, window_bounds = array<i64: 8, 10>}, {pipeline_mode = #tpu.pipeline_mode<synchronous>, transform_indices = @transform_2, window_bounds = array<i64: 1, 32>}, {pipeline_mode = #tpu.pipeline_mode<synchronous>, transform_indices = @transform_3, window_bounds = array<i64: 10, 24>}, {pipeline_mode = #tpu.pipeline_mode<synchronous>, transform_indices = @transform_4, window_bounds = array<i64: 24, 8>}, {pipeline_mode = #tpu.pipeline_mode<synchronous>, transform_indices = @transform_5, window_bounds = array<i64: 32, 64>}, {pipeline_mode = #tpu.pipeline_mode<synchronous>, transform_indices = @transform_6, window_bounds = array<i64: 8, 64>}, {pipeline_mode = #tpu.pipeline_mode<synchronous>, transform_indices = @transform_7, window_bounds = array<i64: 4, 128>}, {transform_indices = @transform_8, window_bounds = array<i64: 1, 1>}, {transform_indices = @transform_9, window_bounds = array<i64: 1, 1, 8>}]} {
    %c0 = arith.constant 0 : index
    %c0_0 = arith.constant 0 : index
    %c0_1 = arith.constant 0 : index
    %0 = vector.load %arg1[%c0, %c0_0, %c0_1] : memref<8x8x32xbf16, #tpu.memory_space<vmem>>, vector<8x8x32xbf16>
    %1 = arith.extf %0 : vector<8x8x32xbf16> to vector<8x8x32xf32>
    %c0_2 = arith.constant 0 : index
    %c0_3 = arith.constant 0 : index
    %2 = vector.load %arg3[%c0_2, %c0_3] : memref<1x32xf32, #tpu.memory_space<vmem>>, vector<1x32xf32>
    %3 = vector.shape_cast %2 : vector<1x32xf32> to vector<1x1x32xf32>
    %4 = vector.broadcast %3 : vector<1x1x32xf32> to vector<8x8x32xf32>
    %5 = arith.mulf %1, %4 : vector<8x8x32xf32>
    %cst = arith.constant dense<0.000000e+00> : vector<8x8xf32>
    %6 = vector.multi_reduction <add>, %5, %cst [2] : vector<8x8x32xf32> to vector<8x8xf32>
    %cst_4 = arith.constant dense<0xFF800000> : vector<8xf32>
    %7 = vector.multi_reduction <maximumf>, %6, %cst_4 [1] : vector<8x8xf32> to vector<8xf32>
    %8 = vector.shape_cast %7 : vector<8xf32> to vector<8x1xf32>
    %9 = vector.broadcast %8 : vector<8x1xf32> to vector<8x8xf32>
    %10 = arith.subf %6, %9 : vector<8x8xf32>
    %11 = math.exp %10 : vector<8x8xf32>
    %cst_5 = arith.constant dense<0.000000e+00> : vector<8xf32>
    %12 = vector.multi_reduction <add>, %11, %cst_5 [1] : vector<8x8xf32> to vector<8xf32>
    %13 = vector.shape_cast %12 : vector<8xf32> to vector<8x1xf32>
    %14 = tpu.reciprocal %13 {approx = true} : vector<8x1xf32> -> vector<8x1xf32>
    %15 = vector.broadcast %14 : vector<8x1xf32> to vector<8x8xf32>
    %16 = arith.mulf %11, %15 : vector<8x8xf32>
    %17 = vector.shape_cast %16 : vector<8x8xf32> to vector<8x8x1xf32>
    %18 = vector.broadcast %17 : vector<8x8x1xf32> to vector<8x8x32xf32>
    %19 = arith.mulf %18, %1 : vector<8x8x32xf32>
    %cst_6 = arith.constant dense<0.000000e+00> : vector<8x32xf32>
    %20 = vector.multi_reduction <add>, %19, %cst_6 [1] : vector<8x8x32xf32> to vector<8x32xf32>
    %c0_7 = arith.constant 0 : index
    %c0_8 = arith.constant 0 : index
    %21 = vector.load %arg8[%c0_7, %c0_8] : memref<4x128xf32, #tpu.memory_space<vmem>>, vector<1x24xf32>
    %c1 = arith.constant 1 : index
    %c0_9 = arith.constant 0 : index
    %22 = vector.load %arg8[%c1, %c0_9] : memref<4x128xf32, #tpu.memory_space<vmem>>, vector<1x8xf32>
    %c2 = arith.constant 2 : index
    %c0_10 = arith.constant 0 : index
    %23 = vector.load %arg8[%c2, %c0_10] : memref<4x128xf32, #tpu.memory_space<vmem>>, vector<1x64xf32>
    %c3 = arith.constant 3 : index
    %c0_11 = arith.constant 0 : index
    %24 = vector.load %arg8[%c3, %c0_11] : memref<4x128xf32, #tpu.memory_space<vmem>>, vector<1x64xf32>
    %c0_12 = arith.constant 0 : index
    %c0_13 = arith.constant 0 : index
    %25 = vector.load %arg2[%c0_12, %c0_13] : memref<8x10xf32, #tpu.memory_space<vmem>>, vector<8x10xf32>
    %c0_14 = arith.constant 0 : index
    %c0_15 = arith.constant 0 : index
    %26 = vector.load %arg4[%c0_14, %c0_15] : memref<10x24xf32, #tpu.memory_space<vmem>>, vector<10x24xf32>
    %cst_16 = arith.constant dense<0.000000e+00> : vector<8x24xf32>
    %27 = tpu.matmul %25, %26, %cst_16 {dimension_numbers = #tpu.dot_dimension_numbers<[1], [0], [0], [1], [0, 0, 1, 1], [], []>} : vector<8x10xf32>, vector<10x24xf32>, vector<8x24xf32> -> vector<8x24xf32>
    %28 = vector.broadcast %21 : vector<1x24xf32> to vector<8x24xf32>
    %29 = arith.addf %27, %28 : vector<8x24xf32>
    %cst_17 = arith.constant 0.000000e+00 : f32
    %30 = vector.broadcast %cst_17 : f32 to vector<8x24xf32>
    %31 = arith.maximumf %29, %30 : vector<8x24xf32>
    %c0_18 = arith.constant 0 : index
    %c0_19 = arith.constant 0 : index
    %32 = vector.load %arg5[%c0_18, %c0_19] : memref<24x8xf32, #tpu.memory_space<vmem>>, vector<24x8xf32>
    %cst_20 = arith.constant dense<0.000000e+00> : vector<8x8xf32>
    %33 = tpu.matmul %31, %32, %cst_20 {dimension_numbers = #tpu.dot_dimension_numbers<[1], [0], [0], [1], [0, 0, 1, 1], [], []>} : vector<8x24xf32>, vector<24x8xf32>, vector<8x8xf32> -> vector<8x8xf32>
    %34 = vector.broadcast %22 : vector<1x8xf32> to vector<8x8xf32>
    %35 = arith.addf %33, %34 : vector<8x8xf32>
    %c0_21 = arith.constant 0 : index
    %c0_22 = arith.constant 0 : index
    %36 = vector.load %arg6[%c0_21, %c0_22] : memref<32x64xf32, #tpu.memory_space<vmem>>, vector<32x64xf32>
    %cst_23 = arith.constant dense<0.000000e+00> : vector<8x64xf32>
    %37 = tpu.matmul %20, %36, %cst_23 {dimension_numbers = #tpu.dot_dimension_numbers<[1], [0], [0], [1], [0, 0, 1, 1], [], []>} : vector<8x32xf32>, vector<32x64xf32>, vector<8x64xf32> -> vector<8x64xf32>
    %c0_24 = arith.constant 0 : index
    %c0_25 = arith.constant 0 : index
    %38 = vector.load %arg7[%c0_24, %c0_25] : memref<8x64xf32, #tpu.memory_space<vmem>>, vector<8x64xf32>
    %cst_26 = arith.constant dense<0.000000e+00> : vector<8x64xf32>
    %39 = tpu.matmul %35, %38, %cst_26 {dimension_numbers = #tpu.dot_dimension_numbers<[1], [0], [0], [1], [0, 0, 1, 1], [], []>} : vector<8x8xf32>, vector<8x64xf32>, vector<8x64xf32> -> vector<8x64xf32>
    %40 = arith.addf %37, %39 : vector<8x64xf32>
    %41 = vector.broadcast %23 : vector<1x64xf32> to vector<8x64xf32>
    %42 = arith.addf %40, %41 : vector<8x64xf32>
    %cst_27 = arith.constant 0.000000e+00 : f32
    %43 = vector.broadcast %cst_27 : f32 to vector<8x64xf32>
    %44 = arith.maximumf %42, %43 : vector<8x64xf32>
    %45 = vector.broadcast %24 : vector<1x64xf32> to vector<8x64xf32>
    %46 = arith.mulf %44, %45 : vector<8x64xf32>
    %cst_28 = arith.constant dense<0.000000e+00> : vector<8xf32>
    %47 = vector.multi_reduction <add>, %46, %cst_28 [1] : vector<8x64xf32> to vector<8xf32>
    %c0_29 = arith.constant 0 : index
    %c0_30 = arith.constant 0 : index
    %48 = memref.load %arg9[%c0_29, %c0_30] : memref<1x1xf32, #tpu.memory_space<smem>>
    %49 = vector.broadcast %48 : f32 to vector<8xf32>
    %50 = arith.addf %47, %49 : vector<8xf32>
    %51 = vector.shape_cast %50 : vector<8xf32> to vector<1x1x8xf32>
    %c0_31 = arith.constant 0 : index
    %c0_32 = arith.constant 0 : index
    %c0_33 = arith.constant 0 : index
    %52 = vector.load %arg10[%c0_31, %c0_32, %c0_33] : memref<1x1x8xf32, #tpu.memory_space<vmem>>, vector<1x1x8xf32>
    tpu.vector_store %arg10[%c0_31, %c0_32, %c0_33], %51 {strides = array<i32>} : memref<1x1x8xf32, #tpu.memory_space<vmem>>, vector<1x1x8xf32>,
    return
  }
  func.func @transform_0(%arg0: i32) -> (i32, i32, i32) {
    %c0_i32 = arith.constant 0 : i32
    %c0_i32_0 = arith.constant 0 : i32
    %c0_i32_1 = arith.constant 0 : i32
    return %arg0, %c0_i32, %c0_i32_0 : i32, i32, i32
  }
  func.func @transform_1(%arg0: i32) -> (i32, i32) {
    %c0_i32 = arith.constant 0 : i32
    %c0_i32_0 = arith.constant 0 : i32
    return %arg0, %c0_i32 : i32, i32
  }
  func.func @transform_2(%arg0: i32) -> (i32, i32) {
    %c0_i32 = arith.constant 0 : i32
    %c0_i32_0 = arith.constant 0 : i32
    %c0_i32_1 = arith.constant 0 : i32
    return %c0_i32, %c0_i32_0 : i32, i32
  }
  func.func @transform_3(%arg0: i32) -> (i32, i32) {
    %c0_i32 = arith.constant 0 : i32
    %c0_i32_0 = arith.constant 0 : i32
    %c0_i32_1 = arith.constant 0 : i32
    return %c0_i32, %c0_i32_0 : i32, i32
  }
  func.func @transform_4(%arg0: i32) -> (i32, i32) {
    %c0_i32 = arith.constant 0 : i32
    %c0_i32_0 = arith.constant 0 : i32
    %c0_i32_1 = arith.constant 0 : i32
    return %c0_i32, %c0_i32_0 : i32, i32
  }
  func.func @transform_5(%arg0: i32) -> (i32, i32) {
    %c0_i32 = arith.constant 0 : i32
    %c0_i32_0 = arith.constant 0 : i32
    %c0_i32_1 = arith.constant 0 : i32
    return %c0_i32, %c0_i32_0 : i32, i32
  }
  func.func @transform_6(%arg0: i32) -> (i32, i32) {
    %c0_i32 = arith.constant 0 : i32
    %c0_i32_0 = arith.constant 0 : i32
    %c0_i32_1 = arith.constant 0 : i32
    return %c0_i32, %c0_i32_0 : i32, i32
  }
  func.func @transform_7(%arg0: i32) -> (i32, i32) {
    %c0_i32 = arith.constant 0 : i32
    %c0_i32_0 = arith.constant 0 : i32
    %c0_i32_1 = arith.constant 0 : i32
    return %c0_i32, %c0_i32_0 : i32, i32
  }
  func.func @transform_8(%arg0: i32) -> (i32, i32) {
    %c0_i32 = arith.constant 0 : i32
    %c0_i32_0 = arith.constant 0 : i32
    %c0_i32_1 = arith.constant 0 : i32
    return %c0_i32, %c0_i32_0 : i32, i32
  }
  func.func @transform_9(%arg0: i32) -> (i32, i32, i32) {
    %c0_i32 = arith.constant 0 : i32
    %c0_i32_0 = arith.constant 0 : i32
    %c0_i32_1 = arith.constant 0 : i32
    return %arg0, %c0_i32, %c0_i32_0 : i32, i32, i32
  }
}

</mosaic_0001>

<llo_original>
// kernel: tpu_custom_call.1
$region0: #{tpu_custom_call.1}
  #allocation0 [shape = 'u32[]', space=smem, size = 0x4, offset = 0x4, fixed_abs, tag = 'smem constant byte address 0x4 - core index']
  #allocation1 [shape = 'u32[144,128]{1,0:T(1,128)}', space=vmem, size = 0x12000, scoped, tag = 'internal scratch']
  #allocation2 [shape = 'f32[1,1]{1,0:T(1,128)S(6)}', space=smem, size = 0x200, scoped, tag = 'scoped memory for tpu_custom_call.1']
  %s0 = inlined_call_operand.hbm [shape: bf16[32,8,32], index: 0, kind: input, shape index: {}]
  %s1 = inlined_call_operand.vmem [shape: f32[32,10], index: 1, kind: input, shape index: {}]
  %s2 = inlined_call_operand.vmem [shape: f32[1,32], index: 2, kind: input, shape index: {}]
  %s3 = inlined_call_operand.vmem [shape: f32[10,24], index: 3, kind: input, shape index: {}]
  %s4 = inlined_call_operand.vmem [shape: f32[24,8], index: 4, kind: input, shape index: {}]
  %s5 = inlined_call_operand.vmem [shape: f32[32,64], index: 5, kind: input, shape index: {}]
  %s6 = inlined_call_operand.vmem [shape: f32[8,64], index: 6, kind: input, shape index: {}]
  %s7 = inlined_call_operand.vmem [shape: f32[4,128], index: 7, kind: input, shape index: {}]
  %s8 = inlined_call_operand.<no memory space> [shape: f32[1,1], index: 8, kind: input, shape index: {}]
  %s9 = inlined_call_operand.hbm [shape: f32[4,1,8], index: 9, kind: output, shape index: {}]
  %s10 = sld [smem:[#allocation0]]
  $region73: #{tpu_custom_call.1} parent=0
    _
  %s12 = ssub.s32 1, %s10
  %s13 = scalar_select 0, %s12, %s10
  %14 = sst [smem:[#allocation2]] %s8
  $region1: #{tpu_custom_call.1} parent=0
    #allocation3 [shape = 'u8[32768]{0}', space=vmem, size = 0x8000, scoped, tag = 'input window, operand 0']
    #allocation4 [shape = 's32[2]{0}', space=sflag, size = 0x8, scoped, tag = 'scoped memory for tpu_custom_call.1']
    #allocation5 [shape = 's32[2]{0}', space=sflag, size = 0x8, scoped, tag = 'scoped memory for tpu_custom_call.1']
    #allocation6 [shape = 'u8[1024]{0}', space=vmem, size = 0x400, scoped, tag = 'output window, operand 0']
    %15 = vsyncpa [#allocation4], 0
    %s16 = scalar_lea.sflag [#allocation4], 1
    %17 = vsyncpa %s16, 0
    %18 = vsyncpa [#allocation5], 0
    %s19 = scalar_lea.sflag [#allocation5], 1
    %20 = vsyncpa %s19, 0
    loop: start=0, step=1, limit=6
    $region2: #{tpu_custom_call.1} parent=1 // loop_pre_header
      _
    $region3: #{tpu_custom_call.1} parent=1 // loop_header
      %s22 = sphi 0, %s26
      %p23 = scmp.ge.s32.totalorder %s22, 6
      %s32 = sphi 0, %s34
      %s35 = sphi 0, %s32
      %s36 = sphi 0, %s35
      %s52 = sphi 0, %s36
      %s58 = sphi 0, %s60
      %s61 = sphi 0, %s58
      %s62 = sphi 0, %s61
      %s78 = sphi 0, %s62
      %s82 = sphi 0, %s82
      %s84 = sphi 0, %s82
      %s85 = sphi 0, %s84
      %s99 = sphi 0, %s85
      %s103 = sphi 0, %s103
      %s105 = sphi 0, %s103
      %s106 = sphi 0, %s105
      %s120 = sphi 0, %s106
      %s124 = sphi 0, %s124
      %s126 = sphi 0, %s124
      %s127 = sphi 0, %s126
      %s141 = sphi 0, %s127
      %s145 = sphi 0, %s145
      %s147 = sphi 0, %s145
      %s148 = sphi 0, %s147
      %s162 = sphi 0, %s148
      %s166 = sphi 0, %s166
      %s168 = sphi 0, %s166
      %s169 = sphi 0, %s168
      %s183 = sphi 0, %s169
      %s187 = sphi 0, %s187
      %s189 = sphi 0, %s187
      %s190 = sphi 0, %s189
      %s204 = sphi 0, %s190
      %s208 = sphi 0, %s208
      %s210 = sphi 0, %s208
      %s211 = sphi 0, %s210
      %s225 = sphi 0, %s211
      %s231 = sphi 0, %s233
      %s234 = sphi 0, %s231
      %s235 = sphi 0, %s234
      %s251 = sphi 0, %s235
    $region4: #{tpu_custom_call.1} parent=1 // loop_header_branch
      %25 = sbr.rel (%p23) target = $region8
    $region5: #{tpu_custom_call.1} parent=1 // loop_body
      %s27 = ssub.s32 %s22, 1
      %s28 = ssub.s32 %s22, 2
      %s29 = sadd.s32 %s22, 1
      %s30 = ssub.s32 %s22, %s29
      %p31 = scmp.eq.s32.totalorder %s30, 0
      %s33 = sadd.s32 %s32, 1
      %s34 = scalar_select %p31, %s32, %s33
      %p37 = pneg %p31
      %p38 = scmp.eq.s32.totalorder %s22, 3
      %p39 = por %p37, %p38
      %p40 = scmp.ne.s32.totalorder %s32, %s35
      %p41 = scmp.eq.s32.totalorder %s22, 0
      %p42 = por %p40, %p41
      %p43 = scmp.ne.s32.totalorder %s32, %s35
      %p44 = scmp.eq.s32.totalorder %s27, 3
      %p45 = por %p43, %p44
      %p46 = scmp.ne.s32.totalorder %s35, %s36
      %p47 = scmp.eq.s32.totalorder %s27, 0
      %p48 = por %p46, %p47
      %p49 = scmp.ne.s32.totalorder %s35, %s36
      %p50 = scmp.eq.s32.totalorder %s28, 3
      %p51 = por %p49, %p50
      %p53 = scmp.ne.s32.totalorder %s36, %s52
      %p54 = scmp.eq.s32.totalorder %s28, 0
      %p55 = por %p53, %p54
      %s56 = ssub.s32 %s22, %s29
      %p57 = scmp.eq.s32.totalorder %s56, 0
      %s59 = sadd.s32 %s58, 1
      %s60 = scalar_select %p57, %s58, %s59
      %p63 = pneg %p57
      %p64 = scmp.eq.s32.totalorder %s22, 3
      %p65 = por %p63, %p64
      %p66 = scmp.ne.s32.totalorder %s58, %s61
      %p67 = scmp.eq.s32.totalorder %s22, 0
      %p68 = por %p66, %p67
      %p69 = scmp.ne.s32.totalorder %s58, %s61
      %p70 = scmp.eq.s32.totalorder %s27, 3
      %p71 = por %p69, %p70
      %p72 = scmp.ne.s32.totalorder %s61, %s62
      %p73 = scmp.eq.s32.totalorder %s27, 0
      %p74 = por %p72, %p73
      %p75 = scmp.ne.s32.totalorder %s61, %s62
      %p76 = scmp.eq.s32.totalorder %s28, 3
      %p77 = por %p75, %p76
      %p79 = scmp.ne.s32.totalorder %s62, %s78
      %p80 = scmp.eq.s32.totalorder %s28, 0
      %p81 = por %p79, %p80
      %s83 = sadd.s32 %s82, 1
      %p86 = scmp.eq.s32.totalorder %s22, 3
      %p87 = scmp.ne.s32.totalorder %s82, %s84
      %p88 = scmp.eq.s32.totalorder %s22, 0
      %p89 = por %p87, %p88
      %p90 = scmp.ne.s32.totalorder %s82, %s84
      %p91 = scmp.eq.s32.totalorder %s27, 3
      %p92 = por %p90, %p91
      %p93 = scmp.ne.s32.totalorder %s84, %s85
      %p94 = scmp.eq.s32.totalorder %s27, 0
      %p95 = por %p93, %p94
      %p96 = scmp.ne.s32.totalorder %s84, %s85
      %p97 = scmp.eq.s32.totalorder %s28, 3
      %p98 = por %p96, %p97
      %p100 = scmp.ne.s32.totalorder %s85, %s99
      %p101 = scmp.eq.s32.totalorder %s28, 0
      %p102 = por %p100, %p101
      %s104 = sadd.s32 %s103, 1
      %p107 = scmp.eq.s32.totalorder %s22, 3
      %p108 = scmp.ne.s32.totalorder %s103, %s105
      %p109 = scmp.eq.s32.totalorder %s22, 0
      %p110 = por %p108, %p109
      %p111 = scmp.ne.s32.totalorder %s103, %s105
      %p112 = scmp.eq.s32.totalorder %s27, 3
      %p113 = por %p111, %p112
      %p114 = scmp.ne.s32.totalorder %s105, %s106
      %p115 = scmp.eq.s32.totalorder %s27, 0
      %p116 = por %p114, %p115
      %p117 = scmp.ne.s32.totalorder %s105, %s106
      %p118 = scmp.eq.s32.totalorder %s28, 3
      %p119 = por %p117, %p118
      %p121 = scmp.ne.s32.totalorder %s106, %s120
      %p122 = scmp.eq.s32.totalorder %s28, 0
      %p123 = por %p121, %p122
      %s125 = sadd.s32 %s124, 1
      %p128 = scmp.eq.s32.totalorder %s22, 3
      %p129 = scmp.ne.s32.totalorder %s124, %s126
      %p130 = scmp.eq.s32.totalorder %s22, 0
      %p131 = por %p129, %p130
      %p132 = scmp.ne.s32.totalorder %s124, %s126
      %p133 = scmp.eq.s32.totalorder %s27, 3
      %p134 = por %p132, %p133
      %p135 = scmp.ne.s32.totalorder %s126, %s127
      %p136 = scmp.eq.s32.totalorder %s27, 0
      %p137 = por %p135, %p136
      %p138 = scmp.ne.s32.totalorder %s126, %s127
      %p139 = scmp.eq.s32.totalorder %s28, 3
      %p140 = por %p138, %p139
      %p142 = scmp.ne.s32.totalorder %s127, %s141
      %p143 = scmp.eq.s32.totalorder %s28, 0
      %p144 = por %p142, %p143
      %s146 = sadd.s32 %s145, 1
      %p149 = scmp.eq.s32.totalorder %s22, 3
      %p150 = scmp.ne.s32.totalorder %s145, %s147
      %p151 = scmp.eq.s32.totalorder %s22, 0
      %p152 = por %p150, %p151
      %p153 = scmp.ne.s32.totalorder %s145, %s147
      %p154 = scmp.eq.s32.totalorder %s27, 3
      %p155 = por %p153, %p154
      %p156 = scmp.ne.s32.totalorder %s147, %s148
      %p157 = scmp.eq.s32.totalorder %s27, 0
      %p158 = por %p156, %p157
      %p159 = scmp.ne.s32.totalorder %s147, %s148
      %p160 = scmp.eq.s32.totalorder %s28, 3
      %p161 = por %p159, %p160
      %p163 = scmp.ne.s32.totalorder %s148, %s162
      %p164 = scmp.eq.s32.totalorder %s28, 0
      %p165 = por %p163, %p164
      %s167 = sadd.s32 %s166, 1
      %p170 = scmp.eq.s32.totalorder %s22, 3
      %p171 = scmp.ne.s32.totalorder %s166, %s168
      %p172 = scmp.eq.s32.totalorder %s22, 0
      %p173 = por %p171, %p172
      %p174 = scmp.ne.s32.totalorder %s166, %s168
      %p175 = scmp.eq.s32.totalorder %s27, 3
      %p176 = por %p174, %p175
      %p177 = scmp.ne.s32.totalorder %s168, %s169
      %p178 = scmp.eq.s32.totalorder %s27, 0
      %p179 = por %p177, %p178
      %p180 = scmp.ne.s32.totalorder %s168, %s169
      %p181 = scmp.eq.s32.totalorder %s28, 3
      %p182 = por %p180, %p181
      %p184 = scmp.ne.s32.totalorder %s169, %s183
      %p185 = scmp.eq.s32.totalorder %s28, 0
      %p186 = por %p184, %p185
      %s188 = sadd.s32 %s187, 1
      %p191 = scmp.eq.s32.totalorder %s22, 3
      %p192 = scmp.ne.s32.totalorder %s187, %s189
      %p193 = scmp.eq.s32.totalorder %s22, 0
      %p194 = por %p192, %p193
      %p195 = scmp.ne.s32.totalorder %s187, %s189
      %p196 = scmp.eq.s32.totalorder %s27, 3
      %p197 = por %p195, %p196
      %p198 = scmp.ne.s32.totalorder %s189, %s190
      %p199 = scmp.eq.s32.totalorder %s27, 0
      %p200 = por %p198, %p199
      %p201 = scmp.ne.s32.totalorder %s189, %s190
      %p202 = scmp.eq.s32.totalorder %s28, 3
      %p203 = por %p201, %p202
      %p205 = scmp.ne.s32.totalorder %s190, %s204
      %p206 = scmp.eq.s32.totalorder %s28, 0
      %p207 = por %p205, %p206
      %s209 = sadd.s32 %s208, 1
      %p212 = scmp.eq.s32.totalorder %s22, 3
      %p213 = scmp.ne.s32.totalorder %s208, %s210
      %p214 = scmp.eq.s32.totalorder %s22, 0
      %p215 = por %p213, %p214
      %p216 = scmp.ne.s32.totalorder %s208, %s210
      %p217 = scmp.eq.s32.totalorder %s27, 3
      %p218 = por %p216, %p217
      %p219 = scmp.ne.s32.totalorder %s210, %s211
      %p220 = scmp.eq.s32.totalorder %s27, 0
      %p221 = por %p219, %p220
      %p222 = scmp.ne.s32.totalorder %s210, %s211
      %p223 = scmp.eq.s32.totalorder %s28, 3
      %p224 = por %p222, %p223
      %p226 = scmp.ne.s32.totalorder %s211, %s225
      %p227 = scmp.eq.s32.totalorder %s28, 0
      %p228 = por %p226, %p227
      %s229 = ssub.s32 %s22, %s29
      %p230 = scmp.eq.s32.totalorder %s229, 0
      %s232 = sadd.s32 %s231, 1
      %s233 = scalar_select %p230, %s231, %s232
      %p236 = pneg %p230
      %p237 = scmp.eq.s32.totalorder %s22, 3
      %p238 = por %p236, %p237
      %p239 = scmp.ne.s32.totalorder %s231, %s234
      %p240 = scmp.eq.s32.totalorder %s22, 0
      %p241 = por %p239, %p240
      %p242 = scmp.ne.s32.totalorder %s231, %s234
      %p243 = scmp.eq.s32.totalorder %s27, 3
      %p244 = por %p242, %p243
      %p245 = scmp.ne.s32.totalorder %s234, %s235
      %p246 = scmp.eq.s32.totalorder %s27, 0
      %p247 = por %p245, %p246
      %p248 = scmp.ne.s32.totalorder %s234, %s235
      %p249 = scmp.eq.s32.totalorder %s28, 3
      %p250 = por %p248, %p249
      %p252 = scmp.ne.s32.totalorder %s235, %s251
      %p253 = scmp.eq.s32.totalorder %s28, 0
      %p254 = por %p252, %p253
      %p255 = scmp.le.s32.totalorder 1, %s22
      %p256 = scmp.lt.s32.totalorder %s22, 5
      %p257 = pnand %p255, %p256
      %p258 = pneg %p257
      // Predicated region
      $region9: #{tpu_custom_call.1} parent=5 // pred_check
        _
      $region10: #{tpu_custom_call.1} parent=5 // pred_check_branch
        %260 = sbr.rel (%p257) target = $region12
      $region11: #{tpu_custom_call.1} parent=5 // pred_region
        %s261 = ssub.s32 %s22, 1
        // Predicated region
        $region13: #{tpu_custom_call.1} parent=11 // pred_check
          %p262 = pneg %p95
        $region14: #{tpu_custom_call.1} parent=11 // pred_check_branch
          %264 = sbr.rel (%p262) target = $region16
        $region15: #{tpu_custom_call.1} parent=11 // pred_region
          _
        $region16: #{tpu_custom_call.1} parent=11 // pred_fallthru
          _
        // Predicated region
        $region17: #{tpu_custom_call.1} parent=11 // pred_check
          %p265 = pneg %p116
        $region18: #{tpu_custom_call.1} parent=11 // pred_check_branch
          %267 = sbr.rel (%p265) target = $region20
        $region19: #{tpu_custom_call.1} parent=11 // pred_region
          _
        $region20: #{tpu_custom_call.1} parent=11 // pred_fallthru
          _
        // Predicated region
        $region21: #{tpu_custom_call.1} parent=11 // pred_check
          %p268 = pneg %p137
        $region22: #{tpu_custom_call.1} parent=11 // pred_check_branch
          %270 = sbr.rel (%p268) target = $region24
        $region23: #{tpu_custom_call.1} parent=11 // pred_region
          _
        $region24: #{tpu_custom_call.1} parent=11 // pred_fallthru
          _
        // Predicated region
        $region25: #{tpu_custom_call.1} parent=11 // pred_check
          %p271 = pneg %p158
        $region26: #{tpu_custom_call.1} parent=11 // pred_check_branch
          %273 = sbr.rel (%p271) target = $region28
        $region27: #{tpu_custom_call.1} parent=11 // pred_region
          _
        $region28: #{tpu_custom_call.1} parent=11 // pred_fallthru
          _
        // Predicated region
        $region29: #{tpu_custom_call.1} parent=11 // pred_check
          %p274 = pneg %p179
        $region30: #{tpu_custom_call.1} parent=11 // pred_check_branch
          %276 = sbr.rel (%p274) target = $region32
        $region31: #{tpu_custom_call.1} parent=11 // pred_region
          _
        $region32: #{tpu_custom_call.1} parent=11 // pred_fallthru
          _
        // Predicated region
        $region33: #{tpu_custom_call.1} parent=11 // pred_check
          %p277 = pneg %p200
        $region34: #{tpu_custom_call.1} parent=11 // pred_check_branch
          %279 = sbr.rel (%p277) target = $region36
        $region35: #{tpu_custom_call.1} parent=11 // pred_region
          _
        $region36: #{tpu_custom_call.1} parent=11 // pred_fallthru
          _
        // Predicated region
        $region37: #{tpu_custom_call.1} parent=11 // pred_check
          %p280 = pneg %p221
        $region38: #{tpu_custom_call.1} parent=11 // pred_check_branch
          %282 = sbr.rel (%p280) target = $region40
        $region39: #{tpu_custom_call.1} parent=11 // pred_region
          _
        $region40: #{tpu_custom_call.1} parent=11 // pred_fallthru
          _
      $region12: #{tpu_custom_call.1} parent=5 // pred_fallthru
        _
      %p283 = scmp.lt.s32.totalorder %s22, 4
      // Predicated region
      $region41: #{tpu_custom_call.1} parent=5 // pred_check
        %p284 = pneg %p283
      $region42: #{tpu_custom_call.1} parent=5 // pred_check_branch
        %286 = sbr.rel (%p284) target = $region44
      $region43: #{tpu_custom_call.1} parent=5 // pred_region
        // Predicated region
        $region45: #{tpu_custom_call.1} parent=43 // pred_check
          %p287 = pneg %p42
        $region46: #{tpu_custom_call.1} parent=43 // pred_check_branch
          %289 = sbr.rel (%p287) target = $region48
        $region47: #{tpu_custom_call.1} parent=43 // pred_region
          %s290 = sand.u32 %s32, 1
          %s291 = scalar_lea.sflag [#allocation4], %s290
          %s292 = sand.u32 %s32, 1
          %s293 = smul.addr %s292, 32
          %s294 = scalar_lea.vmem [#allocation3], %s293
          %s295 = smul.u32 8, %s22
          %s297 = ssub.s32 512, 512
          %298 = vsyncadd %s291, %s297
          %s299 = smul.addr %s295, 64
          %s300 = scalar_lea.hbm %s0, %s299
          %s301 = sshll.u32 %s294, 4
          %s302 = int_to_ptr.vmem [resolvable:$true] %s301
          %307 = dma.hbm_to_vmem [thread:$0]  %s300, 512, %s302, %s291, 64, 64, 4
        $region48: #{tpu_custom_call.1} parent=43 // pred_fallthru
          _
        // Predicated region
        $region49: #{tpu_custom_call.1} parent=43 // pred_check
          %p308 = pneg %p68
        $region50: #{tpu_custom_call.1} parent=43 // pred_check_branch
          %310 = sbr.rel (%p308) target = $region52
        $region51: #{tpu_custom_call.1} parent=43 // pred_region
          %p311 = scmp.lt.s32.totalorder %s22, 3
          %s312 = scalar_select %p311, %s22, 3
          %s313 = smul.addr %s312, 8
          %s314 = scalar_lea.vmem %s1, %s313
        $region52: #{tpu_custom_call.1} parent=43 // pred_fallthru
          _
      $region44: #{tpu_custom_call.1} parent=5 // pred_fallthru
        _
      %p315 = scmp.le.s32.totalorder 1, %s22
      %p316 = scmp.lt.s32.totalorder %s22, 5
      %p317 = pnand %p315, %p316
      %p318 = pneg %p317
      // Predicated region
      $region53: #{tpu_custom_call.1} parent=5 // pred_check
        _
      $region54: #{tpu_custom_call.1} parent=5 // pred_check_branch
        %320 = sbr.rel (%p317) target = $region56
      $region55: #{tpu_custom_call.1} parent=5 // pred_region
        %s321 = ssub.s32 %s22, 1
        %s322 = sand.u32 %s35, 1
        %s323 = scalar_lea.sflag [#allocation4], %s322
        %s324 = sand.u32 %s35, 1
        %s325 = smul.addr %s324, 32
        %s326 = scalar_lea.vmem [#allocation3], %s325
        // Predicated region
        $region57: #{tpu_custom_call.1} parent=55 // pred_check
          %p327 = pneg %p48
        $region58: #{tpu_custom_call.1} parent=55 // pred_check_branch
          %329 = sbr.rel (%p327) target = $region60
        $region59: #{tpu_custom_call.1} parent=55 // pred_region
          %330 = dma.done %s323, 512
        $region60: #{tpu_custom_call.1} parent=55 // pred_fallthru
          _
        %s331 = sand.u32 %s35, 1
        %s332 = scalar_lea.sflag [#allocation4], %s331
        %s333 = sand.u32 %s35, 1
        %s334 = smul.addr %s333, 32
        %s335 = scalar_lea.vmem [#allocation3], %s334
        %p336 = pneg %p48
        %p337 = pneg %p45
        %p338 = scmp.lt.s32.totalorder %s27, 3
        %s339 = scalar_select %p338, %s27, 3
        %s340 = smul.addr %s339, 8
        %s341 = scalar_lea.vmem %s1, %s340
        %p342 = pneg %p74
        %p343 = pneg %p71
        %p344 = pneg %p95
        %p345 = pneg %p92
        %p346 = pneg %p116
        %p347 = pneg %p113
        %p348 = pneg %p137
        %p349 = pneg %p134
        %p350 = pneg %p158
        %p351 = pneg %p155
        %p352 = pneg %p179
        %p353 = pneg %p176
        %p354 = pneg %p200
        %p355 = pneg %p197
        %p356 = pneg %p221
        %p357 = pneg %p218
        %p358 = pneg %p247
        %p359 = pneg %p244
        %s360 = sand.u32 %s234, 1
        %s361 = scalar_lea.sflag [#allocation5], %s360
        %s362 = sand.u32 %s234, 1
        %s363 = scalar_lea.vmem [#allocation6], %s362
        %s364 = smul.u32 8, %s27
        %p365 = scmp.lt.s32.totalorder %s27, 3
        %s366 = scalar_select %p365, %s27, 3
        %s367 = smul.addr %s366, 8
        %s368 = scalar_lea.vmem %s1, %s367
        %v369 = vld [vmem:[%s326] sm:$0xf]
        %v370 = vld [vmem:[%s326 + $0x4] sm:$0xf]
        %v371 = vld [vmem:[%s326 + $0x8] sm:$0xf]
        %v372 = vld [vmem:[%s326 + $0xc] sm:$0xf]
        %v373 = vld [vmem:[%s326 + $0x10] sm:$0xf]
        %v374 = vld [vmem:[%s326 + $0x14] sm:$0xf]
        %v375 = vld [vmem:[%s326 + $0x18] sm:$0xf]
        %v376 = vld [vmem:[%s326 + $0x1c] sm:$0xf]
        %v377 = vunpack.c.l.bf16 %v369
        %v378 = vunpack.c.l.bf16 %v370
        %v379 = vunpack.c.l.bf16 %v371
        %v380 = vunpack.c.l.bf16 %v372
        %v381 = vunpack.c.l.bf16 %v373
        %v382 = vunpack.c.l.bf16 %v374
        %v383 = vunpack.c.l.bf16 %v375
        %v384 = vunpack.c.l.bf16 %v376
        %v385 = vld [vmem:[%s2] sm:$0x1]
        %v387 = vlaneseq
        %v388 = vshrl.u32 %v387, 7
        %v389 = vsub.s32 0, %v388
        %v390 = vrot.slane %v385, %v389
        %v392 = vmul.f32 %v377, %v390
        %v393 = vmul.f32 %v378, %v390
        %v394 = vmul.f32 %v379, %v390
        %v395 = vmul.f32 %v380, %v390
        %v396 = vmul.f32 %v381, %v390
        %v397 = vmul.f32 %v382, %v390
        %v398 = vmul.f32 %v383, %v390
        %v399 = vmul.f32 %v384, %v390
        %vm400 = vcmask 261120
        %v401 = vsel %vm400, %v392, 0.0
        %402 = vadd.xlane.f32.xlu0 %v401
        %v403 = vpop.xlane.xlu0 %402
        %v404 = vsel %vm400, %v393, 0.0
        %405 = vadd.xlane.f32.xlu0 %v404
        %v406 = vpop.xlane.xlu0 %405
        %v407 = vsel %vm400, %v394, 0.0
        %408 = vadd.xlane.f32.xlu0 %v407
        %v409 = vpop.xlane.xlu0 %408
        %v410 = vsel %vm400, %v395, 0.0
        %411 = vadd.xlane.f32.xlu0 %v410
        %v412 = vpop.xlane.xlu0 %411
        %v413 = vsel %vm400, %v396, 0.0
        %414 = vadd.xlane.f32.xlu0 %v413
        %v415 = vpop.xlane.xlu0 %414
        %v416 = vsel %vm400, %v397, 0.0
        %417 = vadd.xlane.f32.xlu0 %v416
        %v418 = vpop.xlane.xlu0 %417
        %v419 = vsel %vm400, %v398, 0.0
        %420 = vadd.xlane.f32.xlu0 %v419
        %v421 = vpop.xlane.xlu0 %420
        %v422 = vsel %vm400, %v399, 0.0
        %423 = vadd.xlane.f32.xlu0 %v422
        %v424 = vpop.xlane.xlu0 %423
        %v433 = vlaneseq
        %v434 = vand.u32 %v433, 127
        %v435 = vlaneseq
        %v436 = vshrl.u32 %v435, 7
        %v437 = vsub.s32 %v434, %v436
        %v438 = vrot.slane %v403, %v437
        %v439 = vlaneseq
        %v440 = vshrl.u32 %v439, 7
        %v441 = vsub.s32 %v434, %v440
        %v442 = vrot.slane %v406, %v441
        %v443 = vlaneseq
        %v444 = vshrl.u32 %v443, 7
        %v445 = vsub.s32 %v434, %v444
        %v446 = vrot.slane %v409, %v445
        %v447 = vlaneseq
        %v448 = vshrl.u32 %v447, 7
        %v449 = vsub.s32 %v434, %v448
        %v450 = vrot.slane %v412, %v449
        %v451 = vlaneseq
        %v452 = vshrl.u32 %v451, 7
        %v453 = vsub.s32 %v434, %v452
        %v454 = vrot.slane %v415, %v453
        %v455 = vlaneseq
        %v456 = vshrl.u32 %v455, 7
        %v457 = vsub.s32 %v434, %v456
        %v458 = vrot.slane %v418, %v457
        %v459 = vlaneseq
        %v460 = vshrl.u32 %v459, 7
        %v461 = vsub.s32 %v434, %v460
        %v462 = vrot.slane %v421, %v461
        %v463 = vlaneseq
        %v464 = vshrl.u32 %v463, 7
        %v465 = vsub.s32 %v434, %v464
        %v466 = vrot.slane %v424, %v465
        %vm467 = vcmask 1041409
        %v468 = vsel %vm467, %v442, %v438
        %vm469 = vcmask 1042434
        %v470 = vsel %vm469, %v446, %v468
        %vm471 = vcmask 1043459
        %v472 = vsel %vm471, %v450, %v470
        %vm473 = vcmask 1044484
        %v474 = vsel %vm473, %v454, %v472
        %vm475 = vcmask 1045509
        %v476 = vsel %vm475, %v458, %v474
        %vm477 = vcmask 1046534
        %v478 = vsel %vm477, %v462, %v476
        %vm479 = vcmask 1047559
        %v480 = vsel %vm479, %v466, %v478
        %vm482 = vcmask 64512
        %v483 = vsel %vm482, %v480, -inf
        %484 = vmax.xlane.f32.xlu0 %v483
        %v485 = vpop.xlane.xlu0 %484
        %v487 = vlaneseq
        %v488 = vshrl.u32 %v487, 7
        %v489 = vsub.s32 0, %v488
        %v490 = vrot.slane %v485, %v489
        %v491 = vlaneseq
        %v492 = vshrl.u32 %v491, 7
        %v493 = vsub.s32 1, %v492
        %v494 = vrot.slane %v485, %v493
        %v495 = vlaneseq
        %v496 = vshrl.u32 %v495, 7
        %v497 = vsub.s32 2, %v496
        %v498 = vrot.slane %v485, %v497
        %v499 = vlaneseq
        %v500 = vshrl.u32 %v499, 7
        %v501 = vsub.s32 3, %v500
        %v502 = vrot.slane %v485, %v501
        %v503 = vlaneseq
        %v504 = vshrl.u32 %v503, 7
        %v505 = vsub.s32 4, %v504
        %v506 = vrot.slane %v485, %v505
        %v507 = vlaneseq
        %v508 = vshrl.u32 %v507, 7
        %v509 = vsub.s32 5, %v508
        %v510 = vrot.slane %v485, %v509
        %v511 = vlaneseq
        %v512 = vshrl.u32 %v511, 7
        %v513 = vsub.s32 6, %v512
        %v514 = vrot.slane %v485, %v513
        %v515 = vlaneseq
        %v516 = vshrl.u32 %v515, 7
        %v517 = vsub.s32 7, %v516
        %v518 = vrot.slane %v485, %v517
        %v527 = vsub.f32 %v403, %v490
        %v528 = vsub.f32 %v406, %v494
        %v529 = vsub.f32 %v409, %v498
        %v530 = vsub.f32 %v412, %v502
        %v531 = vsub.f32 %v415, %v506
        %v532 = vsub.f32 %v418, %v510
        %v533 = vsub.f32 %v421, %v514
        %v534 = vsub.f32 %v424, %v518
        %v535 = vmul.f32 %v527, 1.442695
        %v536 = vpow.pop %v535
        %v537 = vmul.f32 %v528, 1.442695
        %v538 = vpow.pop %v537
        %v539 = vmul.f32 %v529, 1.442695
        %v540 = vpow.pop %v539
        %v541 = vmul.f32 %v530, 1.442695
        %v542 = vpow.pop %v541
        %v543 = vmul.f32 %v531, 1.442695
        %v544 = vpow.pop %v543
        %v545 = vmul.f32 %v532, 1.442695
        %v546 = vpow.pop %v545
        %v547 = vmul.f32 %v533, 1.442695
        %v548 = vpow.pop %v547
        %v549 = vmul.f32 %v534, 1.442695
        %v550 = vpow.pop %v549
        %559 = vset.pattern.permute.xlu0 0
        %560 = vperm.xlu0 %559, %v536
        %v561 = vpop.permute.xlu0 %560
        %562 = vset.pattern.permute.xlu0 0
        %563 = vperm.xlu0 %562, %v538
        %v564 = vpop.permute.xlu0 %563
        %565 = vset.pattern.permute.xlu0 0
        %566 = vperm.xlu0 %565, %v540
        %v567 = vpop.permute.xlu0 %566
        %568 = vset.pattern.permute.xlu0 0
        %569 = vperm.xlu0 %568, %v542
        %v570 = vpop.permute.xlu0 %569
        %571 = vset.pattern.permute.xlu0 0
        %572 = vperm.xlu0 %571, %v544
        %v573 = vpop.permute.xlu0 %572
        %574 = vset.pattern.permute.xlu0 0
        %575 = vperm.xlu0 %574, %v546
        %v576 = vpop.permute.xlu0 %575
        %577 = vset.pattern.permute.xlu0 0
        %578 = vperm.xlu0 %577, %v548
        %v579 = vpop.permute.xlu0 %578
        %580 = vset.pattern.permute.xlu0 0
        %581 = vperm.xlu0 %580, %v550
        %v582 = vpop.permute.xlu0 %581
        %v583 = vlaneseq
        %v584 = vshrl.u32 %v583, 7
        %v585 = vsub.s32 %v434, %v584
        %v586 = vrot.slane %v561, %v585
        %v587 = vlaneseq
        %v588 = vshrl.u32 %v587, 7
        %v589 = vsub.s32 %v434, %v588
        %v590 = vrot.slane %v564, %v589
        %v591 = vlaneseq
        %v592 = vshrl.u32 %v591, 7
        %v593 = vsub.s32 %v434, %v592
        %v594 = vrot.slane %v567, %v593
        %v595 = vlaneseq
        %v596 = vshrl.u32 %v595, 7
        %v597 = vsub.s32 %v434, %v596
        %v598 = vrot.slane %v570, %v597
        %v599 = vlaneseq
        %v600 = vshrl.u32 %v599, 7
        %v601 = vsub.s32 %v434, %v600
        %v602 = vrot.slane %v573, %v601
        %v603 = vlaneseq
        %v604 = vshrl.u32 %v603, 7
        %v605 = vsub.s32 %v434, %v604
        %v606 = vrot.slane %v576, %v605
        %v607 = vlaneseq
        %v608 = vshrl.u32 %v607, 7
        %v609 = vsub.s32 %v434, %v608
        %v610 = vrot.slane %v579, %v609
        %v611 = vlaneseq
        %v612 = vshrl.u32 %v611, 7
        %v613 = vsub.s32 %v434, %v612
        %v614 = vrot.slane %v582, %v613
        %v615 = vsel %vm467, %v590, %v586
        %v616 = vsel %vm469, %v594, %v615
        %v617 = vsel %vm471, %v598, %v616
        %v618 = vsel %vm473, %v602, %v617
        %v619 = vsel %vm475, %v606, %v618
        %v620 = vsel %vm477, %v610, %v619
        %v621 = vsel %vm479, %v614, %v620
        %v623 = vsel %vm482, %v621, 0.0
        %624 = vadd.xlane.f32.xlu0 %v623
        %v625 = vpop.xlane.xlu0 %624
        %v626 = vrcp.pop %v625
        %v628 = vlaneseq
        %v629 = vshrl.u32 %v628, 7
        %v630 = vsub.s32 0, %v629
        %v631 = vrot.slane %v626, %v630
        %v632 = vlaneseq
        %v633 = vshrl.u32 %v632, 7
        %v634 = vsub.s32 1, %v633
        %v635 = vrot.slane %v626, %v634
        %v636 = vlaneseq
        %v637 = vshrl.u32 %v636, 7
        %v638 = vsub.s32 2, %v637
        %v639 = vrot.slane %v626, %v638
        %v640 = vlaneseq
        %v641 = vshrl.u32 %v640, 7
        %v642 = vsub.s32 3, %v641
        %v643 = vrot.slane %v626, %v642
        %v644 = vlaneseq
        %v645 = vshrl.u32 %v644, 7
        %v646 = vsub.s32 4, %v645
        %v647 = vrot.slane %v626, %v646
        %v648 = vlaneseq
        %v649 = vshrl.u32 %v648, 7
        %v650 = vsub.s32 5, %v649
        %v651 = vrot.slane %v626, %v650
        %v652 = vlaneseq
        %v653 = vshrl.u32 %v652, 7
        %v654 = vsub.s32 6, %v653
        %v655 = vrot.slane %v626, %v654
        %v656 = vlaneseq
        %v657 = vshrl.u32 %v656, 7
        %v658 = vsub.s32 7, %v657
        %v659 = vrot.slane %v626, %v658
        %v668 = vmul.f32 %v536, %v631
        %v669 = vmul.f32 %v538, %v635
        %v670 = vmul.f32 %v540, %v639
        %v671 = vmul.f32 %v542, %v643
        %v672 = vmul.f32 %v544, %v647
        %v673 = vmul.f32 %v546, %v651
        %v674 = vmul.f32 %v548, %v655
        %v675 = vmul.f32 %v550, %v659
        %677 = vset.pattern.permute.xlu0 0
        %678 = vperm.xlu0 %677, %v668
        %v679 = vpop.permute.xlu0 %678
        %682 = vset.pattern.permute.xlu0 0
        %683 = vperm.xlu0 %682, %v669
        %v684 = vpop.permute.xlu0 %683
        %687 = vset.pattern.permute.xlu0 0
        %688 = vperm.xlu0 %687, %v670
        %v689 = vpop.permute.xlu0 %688
        %692 = vset.pattern.permute.xlu0 0
        %693 = vperm.xlu0 %692, %v671
        %v694 = vpop.permute.xlu0 %693
        %697 = vset.pattern.permute.xlu0 0
        %698 = vperm.xlu0 %697, %v672
        %v699 = vpop.permute.xlu0 %698
        %702 = vset.pattern.permute.xlu0 0
        %703 = vperm.xlu0 %702, %v673
        %v704 = vpop.permute.xlu0 %703
        %707 = vset.pattern.permute.xlu0 0
        %708 = vperm.xlu0 %707, %v674
        %v709 = vpop.permute.xlu0 %708
        %712 = vset.pattern.permute.xlu0 0
        %713 = vperm.xlu0 %712, %v675
        %v714 = vpop.permute.xlu0 %713
        %v716 = vmul.f32 %v679, %v377
        %v717 = vmul.f32 %v684, %v378
        %v718 = vmul.f32 %v689, %v379
        %v719 = vmul.f32 %v694, %v380
        %v720 = vmul.f32 %v699, %v381
        %v721 = vmul.f32 %v704, %v382
        %v722 = vmul.f32 %v709, %v383
        %v723 = vmul.f32 %v714, %v384
        %v724 = vsel %vm400, %v716, 0.0
        %v725 = vrot.slane %v724, 4
        %v726 = vadd.f32 %v724, %v725
        %v727 = vrot.slane %v726, 2
        %v728 = vadd.f32 %v726, %v727
        %v729 = vrot.slane %v728, 1
        %v730 = vadd.f32 %v728, %v729
        %v731 = vsel %vm400, %v717, 0.0
        %v732 = vrot.slane %v731, 4
        %v733 = vadd.f32 %v731, %v732
        %v734 = vrot.slane %v733, 2
        %v735 = vadd.f32 %v733, %v734
        %v736 = vrot.slane %v735, 1
        %v737 = vadd.f32 %v735, %v736
        %v738 = vsel %vm400, %v718, 0.0
        %v739 = vrot.slane %v738, 4
        %v740 = vadd.f32 %v738, %v739
        %v741 = vrot.slane %v740, 2
        %v742 = vadd.f32 %v740, %v741
        %v743 = vrot.slane %v742, 1
        %v744 = vadd.f32 %v742, %v743
        %v745 = vsel %vm400, %v719, 0.0
        %v746 = vrot.slane %v745, 4
        %v747 = vadd.f32 %v745, %v746
        %v748 = vrot.slane %v747, 2
        %v749 = vadd.f32 %v747, %v748
        %v750 = vrot.slane %v749, 1
        %v751 = vadd.f32 %v749, %v750
        %v752 = vsel %vm400, %v720, 0.0
        %v753 = vrot.slane %v752, 4
        %v754 = vadd.f32 %v752, %v753
        %v755 = vrot.slane %v754, 2
        %v756 = vadd.f32 %v754, %v755
        %v757 = vrot.slane %v756, 1
        %v758 = vadd.f32 %v756, %v757
        %v759 = vsel %vm400, %v721, 0.0
        %v760 = vrot.slane %v759, 4
        %v761 = vadd.f32 %v759, %v760
        %v762 = vrot.slane %v761, 2
        %v763 = vadd.f32 %v761, %v762
        %v764 = vrot.slane %v763, 1
        %v765 = vadd.f32 %v763, %v764
        %v766 = vsel %vm400, %v722, 0.0
        %v767 = vrot.slane %v766, 4
        %v768 = vadd.f32 %v766, %v767
        %v769 = vrot.slane %v768, 2
        %v770 = vadd.f32 %v768, %v769
        %v771 = vrot.slane %v770, 1
        %v772 = vadd.f32 %v770, %v771
        %v773 = vsel %vm400, %v723, 0.0
        %v774 = vrot.slane %v773, 4
        %v775 = vadd.f32 %v773, %v774
        %v776 = vrot.slane %v775, 2
        %v777 = vadd.f32 %v775, %v776
        %v778 = vrot.slane %v777, 1
        %v779 = vadd.f32 %v777, %v778
        %v780 = vld [vmem:[%s7] sm:$0x1]
        %v781 = vld [vmem:[%s7 + $0x1] sm:$0x1]
        %v782 = vld [vmem:[%s7 + $0x2] sm:$0x1]
        %v783 = vld [vmem:[%s7 + $0x3] sm:$0x1]
        %v784 = vld [vmem:[%s368] sm:$0xff]
        %v785 = vld [vmem:[%s3] sm:$0xff]
        %v786 = vld [vmem:[%s3 + $0x8] sm:$0x3]
        %v787 = vlaneseq
        %v788 = vshrl.u32 %v787, 7
        %v789 = vsub.s32 0, %v788
        %v790 = vrot.slane %v780, %v789
        %vm791 = vcmask 80896
        %v793 = vsel %vm791, %v784, 0
        %vm795 = vcmask 1041408
        %v797 = vsel %vm795, %v786, 0
        %799 = vmatprep.subr.mxu0 0.0
        %800 = vmatpush1.msra.mxu0 %v785
        %801 = vmatprep.subr.mxu0 0.0
        %802 = vmatpush1.msra.mxu0 %v797
        %803 = vmatprep.subr.mxu0 0.0
        %804 = vmatpush1.msra.mxu0 0.0
        %805 = vmatprep.subr.mxu0 0.0
        %806 = vmatpush1.msra.mxu0 0.0
        %807 = vmatprep.subr.mxu0 0.0
        %808 = vmatpush1.msra.mxu0 0.0
        %809 = vmatprep.subr.mxu0 0.0
        %810 = vmatpush1.msra.mxu0 0.0
        %811 = vmatprep.subr.mxu0 0.0
        %812 = vmatpush1.msra.mxu0 0.0
        %813 = vmatprep.subr.mxu0 0.0
        %814 = vmatpush1.msra.mxu0 0.0
        %815 = vmatprep.subr.mxu0 0.0
        %816 = vmatpush1.msra.mxu0 0.0
        %817 = vmatprep.subr.mxu0 0.0
        %818 = vmatpush1.msra.mxu0 0.0
        %819 = vmatprep.subr.mxu0 0.0
        %820 = vmatpush1.msra.mxu0 0.0
        %821 = vmatprep.subr.mxu0 0.0
        %822 = vmatpush1.msra.mxu0 0.0
        %823 = vmatprep.subr.mxu0 0.0
        %824 = vmatpush1.msra.mxu0 0.0
        %825 = vmatprep.subr.mxu0 0.0
        %826 = vmatpush1.msra.mxu0 0.0
        %827 = vmatprep.subr.mxu0 0.0
        %828 = vmatpush1.msra.mxu0 0.0
        %829 = vmatprep.subr.mxu0 0.0
        %830 = vmatpush1.msra.mxu0 0.0
        %831 = vmatprep.subr.mxu0 0.0
        %832 = vmatpush1.msra.mxu0 0.0
        %833 = vmatprep.subr.mxu0 0.0
        %834 = vmatpush1.msra.mxu0 0.0
        %835 = vmatprep.subr.mxu0 0.0
        %836 = vmatpush1.msra.mxu0 0.0
        %837 = vmatprep.subr.mxu0 0.0
        %838 = vmatpush1.msra.mxu0 0.0
        %839 = vmatprep.subr.mxu0 0.0
        %840 = vmatpush1.msra.mxu0 0.0
        %841 = vmatprep.subr.mxu0 0.0
        %842 = vmatpush1.msra.mxu0 0.0
        %843 = vmatprep.subr.mxu0 0.0
        %844 = vmatpush1.msra.mxu0 0.0
        %845 = vmatprep.subr.mxu0 0.0
        %846 = vmatpush1.msra.mxu0 0.0
        %847 = vmatprep.subr.mxu0 0.0
        %848 = vmatpush1.msra.mxu0 0.0
        %849 = vmatprep.subr.mxu0 0.0
        %850 = vmatpush1.msra.mxu0 0.0
        %851 = vmatprep.subr.mxu0 0.0
        %852 = vmatpush1.msra.mxu0 0.0
        %853 = vmatprep.subr.mxu0 0.0
        %854 = vmatpush1.msra.mxu0 0.0
        %855 = vmatprep.subr.mxu0 0.0
        %856 = vmatpush1.msra.mxu0 0.0
        %857 = vmatprep.subr.mxu0 0.0
        %858 = vmatpush1.msra.mxu0 0.0
        %859 = vmatprep.subr.mxu0 0.0
        %860 = vmatpush1.msra.mxu0 0.0
        %861 = vmatprep.subr.mxu0 0.0
        %862 = vmatpush1.msra.mxu0 0.0
        %863 = vmatprep.mubr.f32.mxu0 0.0
        %864 = vmatmul.mubr.f32.gmra.mrb[0].mxu0 %v793
        %v865 = vpop.f32.mrb[0].mxu0
        %v866 = vadd.f32 %v790, %v865
        %v867 = vpop.f32.mrb[0].mxu0
        %868 = vdwg.mxu0
        %v869 = vmax.f32 %v866, 0.0
        %v870 = vld [vmem:[%s4] sm:$0xff]
        %v871 = vld [vmem:[%s4 + $0x8] sm:$0xff]
        %v872 = vld [vmem:[%s4 + $0x10] sm:$0xff]
        %v873 = vlaneseq
        %v874 = vshrl.u32 %v873, 7
        %v875 = vsub.s32 0, %v874
        %v876 = vrot.slane %v781, %v875
        %vm877 = vcmask 195584
        %v879 = vsel %vm877, %v869, 0
        %881 = vmatprep.subr.mxu0 0.0
        %882 = vmatpush1.msra.mxu0 %v870
        %883 = vmatprep.subr.mxu0 0.0
        %884 = vmatpush1.msra.mxu0 %v871
        %885 = vmatprep.subr.mxu0 0.0
        %886 = vmatpush1.msra.mxu0 %v872
        %887 = vmatprep.subr.mxu0 0.0
        %888 = vmatpush1.msra.mxu0 0.0
        %889 = vmatprep.subr.mxu0 0.0
        %890 = vmatpush1.msra.mxu0 0.0
        %891 = vmatprep.subr.mxu0 0.0
        %892 = vmatpush1.msra.mxu0 0.0
        %893 = vmatprep.subr.mxu0 0.0
        %894 = vmatpush1.msra.mxu0 0.0
        %895 = vmatprep.subr.mxu0 0.0
        %896 = vmatpush1.msra.mxu0 0.0
        %897 = vmatprep.subr.mxu0 0.0
        %898 = vmatpush1.msra.mxu0 0.0
        %899 = vmatprep.subr.mxu0 0.0
        %900 = vmatpush1.msra.mxu0 0.0
        %901 = vmatprep.subr.mxu0 0.0
        %902 = vmatpush1.msra.mxu0 0.0
        %903 = vmatprep.subr.mxu0 0.0
        %904 = vmatpush1.msra.mxu0 0.0
        %905 = vmatprep.subr.mxu0 0.0
        %906 = vmatpush1.msra.mxu0 0.0
        %907 = vmatprep.subr.mxu0 0.0
        %908 = vmatpush1.msra.mxu0 0.0
        %909 = vmatprep.subr.mxu0 0.0
        %910 = vmatpush1.msra.mxu0 0.0
        %911 = vmatprep.subr.mxu0 0.0
        %912 = vmatpush1.msra.mxu0 0.0
        %913 = vmatprep.subr.mxu0 0.0
        %914 = vmatpush1.msra.mxu0 0.0
        %915 = vmatprep.subr.mxu0 0.0
        %916 = vmatpush1.msra.mxu0 0.0
        %917 = vmatprep.subr.mxu0 0.0
        %918 = vmatpush1.msra.mxu0 0.0
        %919 = vmatprep.subr.mxu0 0.0
        %920 = vmatpush1.msra.mxu0 0.0
        %921 = vmatprep.subr.mxu0 0.0
        %922 = vmatpush1.msra.mxu0 0.0
        %923 = vmatprep.subr.mxu0 0.0
        %924 = vmatpush1.msra.mxu0 0.0
        %925 = vmatprep.subr.mxu0 0.0
        %926 = vmatpush1.msra.mxu0 0.0
        %927 = vmatprep.subr.mxu0 0.0
        %928 = vmatpush1.msra.mxu0 0.0
        %929 = vmatprep.subr.mxu0 0.0
        %930 = vmatpush1.msra.mxu0 0.0
        %931 = vmatprep.subr.mxu0 0.0
        %932 = vmatpush1.msra.mxu0 0.0
        %933 = vmatprep.subr.mxu0 0.0
        %934 = vmatpush1.msra.mxu0 0.0
        %935 = vmatprep.subr.mxu0 0.0
        %936 = vmatpush1.msra.mxu0 0.0
        %937 = vmatprep.subr.mxu0 0.0
        %938 = vmatpush1.msra.mxu0 0.0
        %939 = vmatprep.subr.mxu0 0.0
        %940 = vmatpush1.msra.mxu0 0.0
        %941 = vmatprep.subr.mxu0 0.0
        %942 = vmatpush1.msra.mxu0 0.0
        %943 = vmatprep.subr.mxu0 0.0
        %944 = vmatpush1.msra.mxu0 0.0
        %945 = vmatprep.mubr.f32.mxu0 0.0
        %946 = vmatmul.mubr.f32.gmra.mrb[0].mxu0 %v879
        %v947 = vpop.f32.mrb[0].mxu0
        %v948 = vadd.f32 %v876, %v947
        %v949 = vpop.f32.mrb[0].mxu0
        %950 = vdwg.mxu0
        %v951 = vld [vmem:[%s5] sm:$0xff]
        %v952 = vld [vmem:[%s5 + $0x8] sm:$0xff]
        %v953 = vld [vmem:[%s5 + $0x10] sm:$0xff]
        %v954 = vld [vmem:[%s5 + $0x18] sm:$0xff]
        %v955 = vld [vmem:[%s6] sm:$0xff]
        %v957 = vsel %vm482, %v948, 0
        %959 = vmatprep.subr.mxu0 0.0
        %960 = vmatpush1.msra.mxu0 %v955
        %961 = vmatprep.subr.mxu0 0.0
        %962 = vmatpush1.msra.mxu0 0.0
        %963 = vmatprep.subr.mxu0 0.0
        %964 = vmatpush1.msra.mxu0 0.0
        %965 = vmatprep.subr.mxu0 0.0
        %966 = vmatpush1.msra.mxu0 0.0
        %967 = vmatprep.subr.mxu0 0.0
        %968 = vmatpush1.msra.mxu0 0.0
        %969 = vmatprep.subr.mxu0 0.0
        %970 = vmatpush1.msra.mxu0 0.0
        %971 = vmatprep.subr.mxu0 0.0
        %972 = vmatpush1.msra.mxu0 0.0
        %973 = vmatprep.subr.mxu0 0.0
        %974 = vmatpush1.msra.mxu0 0.0
        %975 = vmatprep.subr.mxu0 0.0
        %976 = vmatpush1.msra.mxu0 0.0
        %977 = vmatprep.subr.mxu0 0.0
        %978 = vmatpush1.msra.mxu0 0.0
        %979 = vmatprep.subr.mxu0 0.0
        %980 = vmatpush1.msra.mxu0 0.0
        %981 = vmatprep.subr.mxu0 0.0
        %982 = vmatpush1.msra.mxu0 0.0
        %983 = vmatprep.subr.mxu0 0.0
        %984 = vmatpush1.msra.mxu0 0.0
        %985 = vmatprep.subr.mxu0 0.0
        %986 = vmatpush1.msra.mxu0 0.0
        %987 = vmatprep.subr.mxu0 0.0
        %988 = vmatpush1.msra.mxu0 0.0
        %989 = vmatprep.subr.mxu0 0.0
        %990 = vmatpush1.msra.mxu0 0.0
        %991 = vmatprep.subr.mxu0 0.0
        %992 = vmatpush1.msra.mxu0 0.0
        %993 = vmatprep.subr.mxu0 0.0
        %994 = vmatpush1.msra.mxu0 0.0
        %995 = vmatprep.subr.mxu0 0.0
        %996 = vmatpush1.msra.mxu0 0.0
        %997 = vmatprep.subr.mxu0 0.0
        %998 = vmatpush1.msra.mxu0 0.0
        %999 = vmatprep.subr.mxu0 0.0
        %1000 = vmatpush1.msra.mxu0 0.0
        %1001 = vmatprep.subr.mxu0 0.0
        %1002 = vmatpush1.msra.mxu0 0.0
        %1003 = vmatprep.subr.mxu0 0.0
        %1004 = vmatpush1.msra.mxu0 0.0
        %1005 = vmatprep.subr.mxu0 0.0
        %1006 = vmatpush1.msra.mxu0 0.0
        %1007 = vmatprep.subr.mxu0 0.0
        %1008 = vmatpush1.msra.mxu0 0.0
        %1009 = vmatprep.subr.mxu0 0.0
        %1010 = vmatpush1.msra.mxu0 0.0
        %1011 = vmatprep.subr.mxu0 0.0
        %1012 = vmatpush1.msra.mxu0 0.0
        %1013 = vmatprep.subr.mxu0 0.0
        %1014 = vmatpush1.msra.mxu0 0.0
        %1015 = vmatprep.subr.mxu0 0.0
        %1016 = vmatpush1.msra.mxu0 0.0
        %1017 = vmatprep.subr.mxu0 0.0
        %1018 = vmatpush1.msra.mxu0 0.0
        %1019 = vmatprep.subr.mxu0 0.0
        %1020 = vmatpush1.msra.mxu0 0.0
        %1021 = vmatprep.subr.mxu0 0.0
        %1022 = vmatpush1.msra.mxu0 0.0
        %1023 = vmatprep.mubr.f32.mxu0 0.0
        %1024 = vmatmul.mubr.f32.gmra.mrb[0].mxu0 %v957
        %v1025 = vpop.f32.mrb[0].mxu0
        %v1026 = vadd.f32 0.0, %v1025
        %v1027 = vpop.f32.mrb[0].mxu0
        %1028 = vdwg.mxu0
        %v1037 = vsel %vm467, %v737, %v730
        %v1038 = vsel %vm469, %v744, %v1037
        %v1039 = vsel %vm471, %v751, %v1038
        %v1040 = vsel %vm473, %v758, %v1039
        %v1041 = vsel %vm475, %v765, %v1040
        %v1042 = vsel %vm477, %v772, %v1041
        %v1043 = vsel %vm479, %v779, %v1042
        %v1044 = vsel %vm400, %v1043, 0
        %1046 = vmatprep.subr.mxu0 0.0
        %1047 = vmatpush1.msra.mxu0 %v951
        %1048 = vmatprep.subr.mxu0 0.0
        %1049 = vmatpush1.msra.mxu0 %v952
        %1050 = vmatprep.subr.mxu0 0.0
        %1051 = vmatpush1.msra.mxu0 %v953
        %1052 = vmatprep.subr.mxu0 0.0
        %1053 = vmatpush1.msra.mxu0 %v954
        %1054 = vmatprep.subr.mxu0 0.0
        %1055 = vmatpush1.msra.mxu0 0.0
        %1056 = vmatprep.subr.mxu0 0.0
        %1057 = vmatpush1.msra.mxu0 0.0
        %1058 = vmatprep.subr.mxu0 0.0
        %1059 = vmatpush1.msra.mxu0 0.0
        %1060 = vmatprep.subr.mxu0 0.0
        %1061 = vmatpush1.msra.mxu0 0.0
        %1062 = vmatprep.subr.mxu0 0.0
        %1063 = vmatpush1.msra.mxu0 0.0
        %1064 = vmatprep.subr.mxu0 0.0
        %1065 = vmatpush1.msra.mxu0 0.0
        %1066 = vmatprep.subr.mxu0 0.0
        %1067 = vmatpush1.msra.mxu0 0.0
        %1068 = vmatprep.subr.mxu0 0.0
        %1069 = vmatpush1.msra.mxu0 0.0
        %1070 = vmatprep.subr.mxu0 0.0
        %1071 = vmatpush1.msra.mxu0 0.0
        %1072 = vmatprep.subr.mxu0 0.0
        %1073 = vmatpush1.msra.mxu0 0.0
        %1074 = vmatprep.subr.mxu0 0.0
        %1075 = vmatpush1.msra.mxu0 0.0
        %1076 = vmatprep.subr.mxu0 0.0
        %1077 = vmatpush1.msra.mxu0 0.0
        %1078 = vmatprep.subr.mxu0 0.0
        %1079 = vmatpush1.msra.mxu0 0.0
        %1080 = vmatprep.subr.mxu0 0.0
        %1081 = vmatpush1.msra.mxu0 0.0
        %1082 = vmatprep.subr.mxu0 0.0
        %1083 = vmatpush1.msra.mxu0 0.0
        %1084 = vmatprep.subr.mxu0 0.0
        %1085 = vmatpush1.msra.mxu0 0.0
        %1086 = vmatprep.subr.mxu0 0.0
        %1087 = vmatpush1.msra.mxu0 0.0
        %1088 = vmatprep.subr.mxu0 0.0
        %1089 = vmatpush1.msra.mxu0 0.0
        %1090 = vmatprep.subr.mxu0 0.0
        %1091 = vmatpush1.msra.mxu0 0.0
        %1092 = vmatprep.subr.mxu0 0.0
        %1093 = vmatpush1.msra.mxu0 0.0
        %1094 = vmatprep.subr.mxu0 0.0
        %1095 = vmatpush1.msra.mxu0 0.0
        %1096 = vmatprep.subr.mxu0 0.0
        %1097 = vmatpush1.msra.mxu0 0.0
        %1098 = vmatprep.subr.mxu0 0.0
        %1099 = vmatpush1.msra.mxu0 0.0
        %1100 = vmatprep.subr.mxu0 0.0
        %1101 = vmatpush1.msra.mxu0 0.0
        %1102 = vmatprep.subr.mxu0 0.0
        %1103 = vmatpush1.msra.mxu0 0.0
        %1104 = vmatprep.subr.mxu0 0.0
        %1105 = vmatpush1.msra.mxu0 0.0
        %1106 = vmatprep.subr.mxu0 0.0
        %1107 = vmatpush1.msra.mxu0 0.0
        %1108 = vmatprep.subr.mxu0 0.0
        %1109 = vmatpush1.msra.mxu0 0.0
        %1110 = vmatprep.mubr.f32.mxu0 0.0
        %1111 = vmatmul.mubr.f32.gmra.mrb[0].mxu0 %v1044
        %v1112 = vpop.f32.mrb[0].mxu0
        %v1113 = vadd.f32 %v1026, %v1112
        %v1114 = vpop.f32.mrb[0].mxu0
        %1115 = vdwg.mxu0
        %v1116 = vlaneseq
        %v1117 = vshrl.u32 %v1116, 7
        %v1118 = vsub.s32 0, %v1117
        %v1119 = vrot.slane %v782, %v1118
        %v1120 = vadd.f32 %v1113, %v1119
        %v1121 = vmax.f32 %v1120, 0.0
        %v1122 = vlaneseq
        %v1123 = vshrl.u32 %v1122, 7
        %v1124 = vsub.s32 0, %v1123
        %v1125 = vrot.slane %v783, %v1124
        %v1126 = vmul.f32 %v1121, %v1125
        %vm1127 = vcmask 523264
        %v1128 = vsel %vm1127, %v1126, 0.0
        %1129 = vadd.xlane.f32.xlu0 %v1128
        %v1130 = vpop.xlane.xlu0 %1129
        %s1131 = sld [smem:[#allocation2]]
        %v1132 = vstv %s1131
        %v1133 = vadd.f32 %v1130, %v1132
        %v1135 = vlaneseq
        %v1136 = vshrl.u32 %v1135, 7
        %v1137 = vsub.s32 %v434, %v1136
        %v1138 = vrot.slane %v1133, %v1137
        %vm1140 = vcmask 57344
        %1141 = vst.msk [vmem:[%s363] sm:$0x1] %vm1140, %v1138
        %s1142 = sand.u32 %s234, 1
        %s1143 = scalar_lea.sflag [#allocation5], %s1142
        %s1144 = sand.u32 %s234, 1
        %s1145 = scalar_lea.vmem [#allocation6], %s1144
        // Predicated region
        $region61: #{tpu_custom_call.1} parent=55 // pred_check
          %p1146 = pneg %p244
        $region62: #{tpu_custom_call.1} parent=55 // pred_check_branch
          %1148 = sbr.rel (%p1146) target = $region64
        $region63: #{tpu_custom_call.1} parent=55 // pred_region
          %s1150 = ssub.s32 16, 16
          %1151 = vsyncadd %s1143, %s1150
          %s1152 = smul.addr %s27, 16
          %s1153 = scalar_lea.hbm %s9, %s1152
          %s1155 = sshll.u32 %s1145, 4
          %s1156 = int_to_ptr.vmem [resolvable:$true] %s1155
          %1158 = dma.vmem_to_hbm [thread:$0]  %s1156, 16, %s1153, %s1143
        $region64: #{tpu_custom_call.1} parent=55 // pred_fallthru
          _
      $region56: #{tpu_custom_call.1} parent=5 // pred_fallthru
        _
      %p1159 = scmp.le.s32.totalorder 2, %s22
      // Predicated region
      $region65: #{tpu_custom_call.1} parent=5 // pred_check
        %p1160 = pneg %p1159
      $region66: #{tpu_custom_call.1} parent=5 // pred_check_branch
        %1162 = sbr.rel (%p1160) target = $region68
      $region67: #{tpu_custom_call.1} parent=5 // pred_region
        %s1163 = ssub.s32 %s22, 2
        // Predicated region
        $region69: #{tpu_custom_call.1} parent=67 // pred_check
          %p1164 = pneg %p250
        $region70: #{tpu_custom_call.1} parent=67 // pred_check_branch
          %1166 = sbr.rel (%p1164) target = $region72
        $region71: #{tpu_custom_call.1} parent=67 // pred_region
          %s1167 = sand.u32 %s235, 1
          %s1168 = scalar_lea.sflag [#allocation5], %s1167
          %s1169 = sand.u32 %s235, 1
          %s1170 = scalar_lea.vmem [#allocation6], %s1169
          %1171 = dma.done %s1168, 16
        $region72: #{tpu_custom_call.1} parent=67 // pred_fallthru
          _
      $region68: #{tpu_custom_call.1} parent=5 // pred_fallthru
        _
    $region6: #{tpu_custom_call.1} parent=1 // loop_footer
      %s26 = sadd.s32 1, %s22
    $region7: #{tpu_custom_call.1} parent=1 // loop_footer_branch
      %21 = sbr.rel target = $region3
    $region8: #{tpu_custom_call.1} parent=1 // loop_exit
      _
    %1172 = vsyncpa [#allocation4], 1
    %s1173 = scalar_lea.sflag [#allocation4], 1
    %1174 = vsyncpa %s1173, 1
    %1175 = vsyncpa [#allocation5], 1
    %s1176 = scalar_lea.sflag [#allocation5], 1
    %1177 = vsyncpa %s1176, 1

</llo_original>
